<compile_context>
chip_gen: v7x
topology: tpu7x:2x2x1
jax: 0.10.0
libtpu: 0.0.40
codegen_flags: <defaults>
</compile_context>

<pallas_src>
import jax
import jax.numpy as jnp
from jax import lax
from jax.experimental import pallas as pl
from jax.experimental.pallas import tpu as pltpu

_EPS = 1e-8  # same eps as torch.cosine_similarity


def _cosine_pair_kernel(anc_ref, pos_ref, neg_ref, cos_ref):
    """Per row-block: [cos(anc,pos), cos(anc,neg)] -> (tb, 2), reducing over D."""
    # Inputs may be bf16 (halves HBM bytes); upcast once after load, math in f32.
    a = anc_ref[...].astype(jnp.float32)
    p = pos_ref[...].astype(jnp.float32)
    n = neg_ref[...].astype(jnp.float32)

    # Lane-dim reductions: VPU accumulation over D/128 lane chunks + one
    # cross-lane reduce each; VALU/XLU have large slack vs the HBM stream.
    ap = jnp.sum(a * p, axis=-1, keepdims=True)     # (tb, 1)
    an = jnp.sum(a * n, axis=-1, keepdims=True)
    na2 = jnp.sum(a * a, axis=-1, keepdims=True)
    np2 = jnp.sum(p * p, axis=-1, keepdims=True)
    nn2 = jnp.sum(n * n, axis=-1, keepdims=True)

    # torch.cosine_similarity: x.y / max(||x||*||y||, eps)
    #   == x.y * rsqrt(max(||x||^2 * ||y||^2, eps^2))
    # rsqrt lands on the otherwise-idle EUP slot; saves sqrt+mul+div per cosine.
    eps2 = jnp.float32(_EPS * _EPS)
    cos_p = ap * lax.rsqrt(jnp.maximum(na2 * np2, eps2))
    cos_n = an * lax.rsqrt(jnp.maximum(na2 * nn2, eps2))

    # Single (tb, 2) store (one vst) instead of two 1-lane masked writes; clamp
    # so rounding can never push |cos| past 1 (arccos would return NaN).
    cos_ref[...] = jnp.clip(jnp.concatenate([cos_p, cos_n], axis=-1), -1.0, 1.0)


def _tpu_config():
    """(tensorcores_per_chip, per-input target block bytes, scoped-VMEM ceiling)."""
    try:
        kind = jax.devices()[0].device_kind.lower()
    except Exception:
        kind = ""
    if "v5" in kind:
        # v5e: 1 TC, 128 MiB physical VMEM but only a 16 MiB scoped default ->
        # keep 2 MiB blocks and explicitly raise the limit below.
        return 1, 2 << 20, 32 << 20
    if "7" in kind:
        # v7x: 2 TCs/chip, only 64 MiB physical VMEM per TC -> cap at 48 MiB.
        return 2, 4 << 20, 48 << 20
    # v6e (and anything else): 1 TC, 128 MiB physical VMEM per TC.
    return 1, 4 << 20, 48 << 20


def _choose_block_rows(batch, dim, itemsize, *, num_cores, input_buffers,
                       target_block_bytes, vmem_budget_bytes):
    """Row tile: big enough to amortize the ~0.35us/step pipeline overhead,
    small enough that 3 inputs x `input_buffers` pipeline copies fit the VMEM
    budget, 8-aligned (16 for packed bf16), and -- on multi-TC chips (v7x) --
    never a single-block grid so ("parallel",) can feed every TensorCore."""
    align = 16 if itemsize < 4 else 8
    bytes_per_row = dim * itemsize

    tb = target_block_bytes // bytes_per_row
    tb = min(tb, vmem_budget_bytes // (3 * input_buffers * bytes_per_row))
    tb = max(align, (tb // align) * align)

    if num_cores > 1 and batch >= num_cores * align:
        per_core = -(-batch // num_cores)            # ceil(B / num_cores)
        per_core = -(-per_core // align) * align     # round up to alignment
        tb = min(tb, per_core)                       # guarantees >= num_cores steps

    return batch if batch <= tb else tb              # full-batch block is always legal


def arccosine_triplet_loss(anc, pos, neg, margin=0.2, block_rows=None,
                           input_buffers=2):
    anc, pos, neg = map(jnp.asarray, (anc, pos, neg))
    common = jnp.result_type(anc.dtype, pos.dtype, neg.dtype)
    # Keep bf16 inputs in bf16 (the kernel is HBM-bandwidth-bound, so halving
    # the streamed bytes ~doubles throughput); everything else streams as f32.
    compute_dtype = jnp.bfloat16 if common == jnp.dtype(jnp.bfloat16) else jnp.float32
    anc = anc.astype(compute_dtype)
    pos = pos.astype(compute_dtype)
    neg = neg.astype(compute_dtype)

    B, D = anc.shape
    itemsize = jnp.dtype(compute_dtype).itemsize
    align = 16 if itemsize < 4 else 8

    num_cores, target_block_bytes, vmem_ceiling = _tpu_config()
    if block_rows is not None:
        tb = B if block_rows >= B else max(align, (min(block_rows, B) // align) * align)
    else:
        tb = _choose_block_rows(
            B, D, itemsize,
            num_cores=num_cores, input_buffers=input_buffers,
            target_block_bytes=target_block_bytes,
            vmem_budget_bytes=vmem_ceiling - (6 << 20))
    grid = (pl.cdiv(B, tb),)  # tail rows handled by Pallas boundary masking

    # Scoped-VMEM limit derived from the *same* numbers the tiling used, so the
    # Python-side budget and the compiler limit can never silently disagree
    # (e.g. v5e's 16 MiB default vs 3 x buffers x 2 MiB input blocks).
    vmem_need = 3 * input_buffers * tb * D * itemsize + 2 * tb * 2 * 4
    vmem_limit = int(min(vmem_ceiling, max(vmem_need + (5 << 20), 16 << 20)))

    spec_kwargs = {}
    if input_buffers != 2:  # optional deeper pipelining; DMA here is fully
        spec_kwargs["pipeline_mode"] = pl.Buffered(input_buffers)  # sequential, rarely helps
    row_spec = pl.BlockSpec((tb, D), lambda i: (i, 0), **spec_kwargs)
    out_spec = pl.BlockSpec((tb, 2), lambda i: (i, 0))

    cos = pl.pallas_call(
        _cosine_pair_kernel,
        out_shape=jax.ShapeDtypeStruct((B, 2), jnp.float32),
        grid_spec=pltpu.PrefetchScalarGridSpec(
            num_scalar_prefetch=0,
            grid=grid,
            in_specs=[row_spec, row_spec, row_spec],
            out_specs=out_spec,
        ),
        compiler_params=pltpu.CompilerParams(
            dimension_semantics=("parallel",),
            vmem_limit_bytes=vmem_limit,
        ),
    )(anc, pos, neg)

    # TODO(synk): arccos has no guaranteed Mosaic TPU lowering, so the final
    # O(B) arccos/relu/mean runs in plain JAX on the tiny (B, 2) kernel output.
    d_p = jnp.arccos(cos[:, 0])
    d_n = jnp.arccos(cos[:, 1])
    div = d_p - d_n + margin
    # reshape(B,-1) + cat-with-zeros + max over dim=1 == relu(div)
    return jnp.mean(jnp.maximum(div, 0.0))


def _reference(anc, pos, neg, margin=0.2):
    """Pure-jnp reference matching the PyTorch module (computed in f32)."""
    anc = jnp.asarray(anc, jnp.float32)
    pos = jnp.asarray(pos, jnp.float32)
    neg = jnp.asarray(neg, jnp.float32)

    def cos(x, y):
        num = jnp.sum(x * y, axis=1)
        den = jnp.maximum(
            jnp.linalg.norm(x, axis=1) * jnp.linalg.norm(y, axis=1), _EPS)
        return jnp.clip(num / den, -1.0, 1.0)

    d_p = jnp.arccos(cos(anc, pos))
    d_n = jnp.arccos(cos(anc, neg))
    return jnp.mean(jnp.maximum(d_p - d_n + margin, 0.0))


if __name__ == "__main__":
    key = jax.random.PRNGKey(0)

    # (B, D, block_rows, dtype): the module's toy shape, a multi-step grid with
    # a non-divisible tail, and a bf16 case exercising the halved-HBM path.
    cases = [
        (8, 32, None, jnp.float32),
        (300, 64, 128, jnp.float32),
        (48, 256, None, jnp.bfloat16),
    ]
    for B, D, br, dt in cases:
        key, k1, k2, k3 = jax.random.split(key, 4)
        anc = jax.random.normal(k1, (B, D), dtype=jnp.float32).astype(dt)
        pos = jax.random.normal(k2, (B, D), dtype=jnp.float32).astype(dt)
        neg = jax.random.normal(k3, (B, D), dtype=jnp.float32).astype(dt)

        out = jax.block_until_ready(
            arccosine_triplet_loss(anc, pos, neg, margin=0.2, block_rows=br))
        ref = _reference(anc, pos, neg, margin=0.2)
        assert jnp.allclose(out, ref, rtol=1e-3, atol=1e-3), (B, D, dt, out, ref)

    print("KERNEL_OK")
</pallas_src>

<mosaic_0001>
module attributes {stable_mosaic.version = 11 : i64} {
  func.func @_cosine_pair_kernel(%arg0: i32, %arg1: memref<8x32xf32, #tpu.memory_space<vmem>>, %arg2: memref<8x32xf32, #tpu.memory_space<vmem>>, %arg3: memref<8x32xf32, #tpu.memory_space<vmem>>, %arg4: memref<8x2xf32, #tpu.memory_space<vmem>>) attributes {dimension_semantics = [#tpu.dimension_semantics<parallel>], iteration_bounds = array<i64: 1>, scalar_prefetch = 0 : i64, scratch_operands = 0 : i64, tpu.core_type = #tpu.core_type<tc>, window_params = [{transform_indices = @transform_0, window_bounds = array<i64: 8, 32>}, {transform_indices = @transform_1, window_bounds = array<i64: 8, 32>}, {transform_indices = @transform_2, window_bounds = array<i64: 8, 32>}, {transform_indices = @transform_3, window_bounds = array<i64: 8, 2>}]} {
    %c0 = arith.constant 0 : index
    %c0_0 = arith.constant 0 : index
    %0 = vector.load %arg1[%c0, %c0_0] : memref<8x32xf32, #tpu.memory_space<vmem>>, vector<8x32xf32>
    %c0_1 = arith.constant 0 : index
    %c0_2 = arith.constant 0 : index
    %1 = vector.load %arg2[%c0_1, %c0_2] : memref<8x32xf32, #tpu.memory_space<vmem>>, vector<8x32xf32>
    %c0_3 = arith.constant 0 : index
    %c0_4 = arith.constant 0 : index
    %2 = vector.load %arg3[%c0_3, %c0_4] : memref<8x32xf32, #tpu.memory_space<vmem>>, vector<8x32xf32>
    %3 = arith.mulf %0, %1 : vector<8x32xf32>
    %cst = arith.constant dense<0.000000e+00> : vector<8xf32>
    %4 = vector.multi_reduction <add>, %3, %cst [1] : vector<8x32xf32> to vector<8xf32>
    %5 = vector.shape_cast %4 : vector<8xf32> to vector<8x1xf32>
    %6 = arith.mulf %0, %2 : vector<8x32xf32>
    %cst_5 = arith.constant dense<0.000000e+00> : vector<8xf32>
    %7 = vector.multi_reduction <add>, %6, %cst_5 [1] : vector<8x32xf32> to vector<8xf32>
    %8 = vector.shape_cast %7 : vector<8xf32> to vector<8x1xf32>
    %9 = arith.mulf %0, %0 : vector<8x32xf32>
    %cst_6 = arith.constant dense<0.000000e+00> : vector<8xf32>
    %10 = vector.multi_reduction <add>, %9, %cst_6 [1] : vector<8x32xf32> to vector<8xf32>
    %11 = vector.shape_cast %10 : vector<8xf32> to vector<8x1xf32>
    %12 = arith.mulf %1, %1 : vector<8x32xf32>
    %cst_7 = arith.constant dense<0.000000e+00> : vector<8xf32>
    %13 = vector.multi_reduction <add>, %12, %cst_7 [1] : vector<8x32xf32> to vector<8xf32>
    %14 = vector.shape_cast %13 : vector<8xf32> to vector<8x1xf32>
    %15 = arith.mulf %2, %2 : vector<8x32xf32>
    %cst_8 = arith.constant dense<0.000000e+00> : vector<8xf32>
    %16 = vector.multi_reduction <add>, %15, %cst_8 [1] : vector<8x32xf32> to vector<8xf32>
    %17 = vector.shape_cast %16 : vector<8xf32> to vector<8x1xf32>
    %18 = arith.mulf %11, %14 : vector<8x1xf32>
    %cst_9 = arith.constant 1.000000e-16 : f32
    %19 = vector.broadcast %cst_9 : f32 to vector<8x1xf32>
    %20 = arith.maximumf %18, %19 : vector<8x1xf32>
    %21 = math.rsqrt %20 : vector<8x1xf32>
    %22 = arith.mulf %5, %21 : vector<8x1xf32>
    %23 = arith.mulf %11, %17 : vector<8x1xf32>
    %cst_10 = arith.constant 1.000000e-16 : f32
    %24 = vector.broadcast %cst_10 : f32 to vector<8x1xf32>
    %25 = arith.maximumf %23, %24 : vector<8x1xf32>
    %26 = math.rsqrt %25 : vector<8x1xf32>
    %27 = arith.mulf %8, %26 : vector<8x1xf32>
    %28 = tpu.concatenate %22, %27 in 1 : vector<8x1xf32>, vector<8x1xf32> -> vector<8x2xf32>
    %cst_11 = arith.constant -1.000000e+00 : f32
    %cst_12 = arith.constant 1.000000e+00 : f32
    %29 = vector.broadcast %cst_11 : f32 to vector<8x2xf32>
    %30 = arith.maximumf %29, %28 : vector<8x2xf32>
    %31 = vector.broadcast %cst_12 : f32 to vector<8x2xf32>
    %32 = arith.minimumf %31, %30 : vector<8x2xf32>
    %c0_13 = arith.constant 0 : index
    %c0_14 = arith.constant 0 : index
    %33 = vector.load %arg4[%c0_13, %c0_14] : memref<8x2xf32, #tpu.memory_space<vmem>>, vector<8x2xf32>
    tpu.vector_store %arg4[%c0_13, %c0_14], %32 {strides = array<i32>} : memref<8x2xf32, #tpu.memory_space<vmem>>, vector<8x2xf32>,
    return
  }
  func.func @transform_0(%arg0: i32) -> (i32, i32) {
    %c0_i32 = arith.constant 0 : i32
    %c0_i32_0 = arith.constant 0 : i32
    return %arg0, %c0_i32 : i32, i32
  }
  func.func @transform_1(%arg0: i32) -> (i32, i32) {
    %c0_i32 = arith.constant 0 : i32
    %c0_i32_0 = arith.constant 0 : i32
    return %arg0, %c0_i32 : i32, i32
  }
  func.func @transform_2(%arg0: i32) -> (i32, i32) {
    %c0_i32 = arith.constant 0 : i32
    %c0_i32_0 = arith.constant 0 : i32
    return %arg0, %c0_i32 : i32, i32
  }
  func.func @transform_3(%arg0: i32) -> (i32, i32) {
    %c0_i32 = arith.constant 0 : i32
    %c0_i32_0 = arith.constant 0 : i32
    return %arg0, %c0_i32 : i32, i32
  }
}

</mosaic_0001>

<llo_original>
// kernel: tpu_custom_call.1
$region0: #{tpu_custom_call.1}
  #allocation0 [shape = 'u32[]', space=smem, size = 0x4, offset = 0x4, fixed_abs, tag = 'smem constant byte address 0x4 - core index']
  #allocation1 [shape = 'u32[144,128]{1,0:T(1,128)}', space=vmem, size = 0x12000, scoped, tag = 'internal scratch']
  %s0 = inlined_call_operand.hbm [shape: f32[8,32], index: 0, kind: input, shape index: {}]
  %s1 = inlined_call_operand.hbm [shape: f32[8,32], index: 1, kind: input, shape index: {}]
  %s2 = inlined_call_operand.hbm [shape: f32[8,32], index: 2, kind: input, shape index: {}]
  %s3 = inlined_call_operand.vmem [shape: f32[8,2], index: 3, kind: output, shape index: {}]
  %s4 = sld [smem:[#allocation0]]
  $region34: #{tpu_custom_call.1} parent=0
    _
  %s6 = ssub.s32 1, %s4
  %s7 = scalar_select 0, %s6, %s4
  $region1: #{tpu_custom_call.1} parent=0
    #allocation2 [shape = 'u8[4096]{0}', space=vmem, size = 0x1000, scoped, tag = 'input window, operand 0, single buffered']
    #allocation3 [shape = 's32[1]{0}', space=sflag, size = 0x4, scoped, tag = 'scoped memory for tpu_custom_call.1']
    #allocation4 [shape = 'u8[4096]{0}', space=vmem, size = 0x1000, scoped, tag = 'input window, operand 1, single buffered']
    #allocation5 [shape = 's32[1]{0}', space=sflag, size = 0x4, scoped, tag = 'scoped memory for tpu_custom_call.1']
    #allocation6 [shape = 'u8[4096]{0}', space=vmem, size = 0x1000, scoped, tag = 'input window, operand 2, single buffered']
    %8 = vsyncpa [#allocation3], 0
    %9 = vsyncpa [#allocation5], 0
    // Predicated region
    $region2: #{tpu_custom_call.1} parent=1 // pred_check
      _
    $region3: #{tpu_custom_call.1} parent=1 // pred_check_branch
      %11 = sbr.rel (0) target = $region5
    $region4: #{tpu_custom_call.1} parent=1 // pred_region
      %s13 = ssub.s32 128, 128
      %14 = vsyncadd [#allocation3], %s13
      %s16 = sshll.u32 [#allocation2], 4
      %s17 = int_to_ptr.vmem [resolvable:$true] %s16
      %19 = dma.hbm_to_vmem [thread:$0]  %s0, 128, %s17, [#allocation3]
    $region5: #{tpu_custom_call.1} parent=1 // pred_fallthru
      _
    // Predicated region
    $region6: #{tpu_custom_call.1} parent=1 // pred_check
      _
    $region7: #{tpu_custom_call.1} parent=1 // pred_check_branch
      %21 = sbr.rel (0) target = $region9
    $region8: #{tpu_custom_call.1} parent=1 // pred_region
      %s23 = ssub.s32 128, 128
      %24 = vsyncadd [#allocation5], %s23
      %s26 = sshll.u32 [#allocation4], 4
      %s27 = int_to_ptr.vmem [resolvable:$true] %s26
      %29 = dma.hbm_to_vmem [thread:$0]  %s1, 128, %s27, [#allocation5]
    $region9: #{tpu_custom_call.1} parent=1 // pred_fallthru
      _
    // Predicated region
    $region10: #{tpu_custom_call.1} parent=1 // pred_check
      _
    $region11: #{tpu_custom_call.1} parent=1 // pred_check_branch
      %31 = sbr.rel (0) target = $region13
    $region12: #{tpu_custom_call.1} parent=1 // pred_region
      %s33 = ssub.s32 128, 128
      %34 = vsyncadd [#allocation5], %s33
      %s36 = sshll.u32 [#allocation6], 4
      %s37 = int_to_ptr.vmem [resolvable:$true] %s36
      %39 = dma.hbm_to_vmem [thread:$0]  %s2, 128, %s37, [#allocation5]
    $region13: #{tpu_custom_call.1} parent=1 // pred_fallthru
      _
    // Predicated region
    $region14: #{tpu_custom_call.1} parent=1 // pred_check
      _
    $region15: #{tpu_custom_call.1} parent=1 // pred_check_branch
      %41 = sbr.rel (0) target = $region17
    $region16: #{tpu_custom_call.1} parent=1 // pred_region
      %42 = dma.done [#allocation3], 128
    $region17: #{tpu_custom_call.1} parent=1 // pred_fallthru
      _
    // Predicated region
    $region18: #{tpu_custom_call.1} parent=1 // pred_check
      _
    $region19: #{tpu_custom_call.1} parent=1 // pred_check_branch
      %44 = sbr.rel (0) target = $region21
    $region20: #{tpu_custom_call.1} parent=1 // pred_region
      %45 = dma.done [#allocation5], 128
    $region21: #{tpu_custom_call.1} parent=1 // pred_fallthru
      _
    // Predicated region
    $region22: #{tpu_custom_call.1} parent=1 // pred_check
      _
    $region23: #{tpu_custom_call.1} parent=1 // pred_check_branch
      %47 = sbr.rel (0) target = $region25
    $region24: #{tpu_custom_call.1} parent=1 // pred_region
      %48 = dma.done [#allocation5], 128
    $region25: #{tpu_custom_call.1} parent=1 // pred_fallthru
      _
    %v49 = vld [vmem:[#allocation2] sm:$0xff]
    %v50 = vld [vmem:[#allocation4] sm:$0xff]
    %v51 = vld [vmem:[#allocation6] sm:$0xff]
    %v52 = vmul.f32 %v49, %v50
    %vm53 = vcmask 261120
    %v54 = vsel %vm53, %v52, 0.0
    %55 = vadd.xlane.f32.xlu0 %v54
    %v56 = vpop.xlane.xlu0 %55
    %v57 = vmul.f32 %v49, %v51
    %v58 = vsel %vm53, %v57, 0.0
    %59 = vadd.xlane.f32.xlu0 %v58
    %v60 = vpop.xlane.xlu0 %59
    %v61 = vmul.f32 %v49, %v49
    %v62 = vsel %vm53, %v61, 0.0
    %63 = vadd.xlane.f32.xlu0 %v62
    %v64 = vpop.xlane.xlu0 %63
    %v65 = vmul.f32 %v50, %v50
    %v66 = vsel %vm53, %v65, 0.0
    %67 = vadd.xlane.f32.xlu0 %v66
    %v68 = vpop.xlane.xlu0 %67
    %v69 = vmul.f32 %v51, %v51
    %v70 = vsel %vm53, %v69, 0.0
    %71 = vadd.xlane.f32.xlu0 %v70
    %v72 = vpop.xlane.xlu0 %71
    %v73 = vmul.f32 %v64, %v68
    %v74 = vmax.f32 %v73, 1e-16
    %v75 = vrsqrt.pop %v74
    %v76 = vmul.f32 %v56, %v75
    %v77 = vmul.f32 %v64, %v72
    %v78 = vmax.f32 %v77, 1e-16
    %v79 = vrsqrt.pop %v78
    %v80 = vmul.f32 %v60, %v79
    %vm81 = vcmask 7168
    %v82 = vsel %vm81, %v76, %v80
    %v83 = vmax.f32 %v82, -1.0
    %v84 = vmin.f32 %v83, 1.0
    %vm85 = vcmask 15360
    %86 = vst.msk [vmem:[%s3] sm:$0xff] %vm85, %v84
    // Predicated region
    $region26: #{tpu_custom_call.1} parent=1 // pred_check
      _
    $region27: #{tpu_custom_call.1} parent=1 // pred_check_branch
      %88 = sbr.rel (0) target = $region29
    $region28: #{tpu_custom_call.1} parent=1 // pred_region
      _
    $region29: #{tpu_custom_call.1} parent=1 // pred_fallthru
      _
    // Predicated region
    $region30: #{tpu_custom_call.1} parent=1 // pred_check
      _
    $region31: #{tpu_custom_call.1} parent=1 // pred_check_branch
      %90 = sbr.rel (0) target = $region33
    $region32: #{tpu_custom_call.1} parent=1 // pred_region
      _
    $region33: #{tpu_custom_call.1} parent=1 // pred_fallthru
      _
    %91 = vsyncpa [#allocation3], 1
    %92 = vsyncpa [#allocation5], 1

</llo_original>
